<compile_context>
chip_gen: v7x
topology: tpu7x:2x2x1
jax: 0.10.0
libtpu: 0.0.40
codegen_flags: <defaults>
</compile_context>

<pallas_src>
import math
import jax
import jax.numpy as jnp
from jax.experimental import pallas as pl
from jax.experimental.pallas import tpu as pltpu

IN_DIM = 30
H1, H2, OUT_DIM = 120, 84, 2
H1_PAD = 128  # fc1 out features 120 -> 128 lanes
H2_PAD = 128  # fc2 out features  84 -> 128 lanes


def mlp_kernel(x_ref, w1_ref, b1_ref, w2_ref, b2_ref, w3_ref, b3_ref, o_ref):
    # One (tb, 30) batch tile per grid step; weights/biases are VMEM-resident across steps.
    # Matmuls use bf16 operands (MXU-native) with f32 accumulation; bias + ReLU in f32.
    x = x_ref[...].astype(jnp.bfloat16)
    h1 = jnp.dot(x, w1_ref[...], preferred_element_type=jnp.float32) + b1_ref[...]
    h1 = jnp.maximum(h1, 0.0)
    h2 = jnp.dot(h1.astype(jnp.bfloat16), w2_ref[...],
                 preferred_element_type=jnp.float32) + b2_ref[...]
    h2 = jnp.maximum(h2, 0.0)
    h3 = jnp.dot(h2.astype(jnp.bfloat16), w3_ref[...],
                 preferred_element_type=jnp.float32) + b3_ref[...]
    o_ref[...] = h3.astype(o_ref.dtype)


def _prep_params(params):
    """Zero-pad lane dims to 128 and cast weights to bf16.

    Padding is mathematically inert: extra fc1/fc2 output columns get zero weight and zero
    bias, relu(0) = 0, and the matching extra input rows of fc2/fc3 are zero.  Biases stay
    f32 so they are added directly to the f32 accumulator.
    """
    w1, b1, w2, b2, w3, b3 = params
    w1p = jnp.pad(w1, ((0, 0), (0, H1_PAD - w1.shape[1]))).astype(jnp.bfloat16)      # (30, 128)
    b1p = jnp.pad(b1, ((0, 0), (0, H1_PAD - b1.shape[1])))                            # (1, 128) f32
    w2p = jnp.pad(w2, ((0, H1_PAD - w2.shape[0]),
                       (0, H2_PAD - w2.shape[1]))).astype(jnp.bfloat16)               # (128, 128)
    b2p = jnp.pad(b2, ((0, 0), (0, H2_PAD - b2.shape[1])))                            # (1, 128) f32
    w3p = jnp.pad(w3, ((0, H2_PAD - w3.shape[0]), (0, 0))).astype(jnp.bfloat16)       # (128, 2)
    return w1p, b1p, w2p, b2p, w3p, b3


def _round_up(v, m):
    return ((v + m - 1) // m) * m


def net_forward(x, params, *, block_b=4096):
    w1p, b1p, w2p, b2p, w3p, b3 = _prep_params(params)

    B, in_dim = x.shape
    assert in_dim == IN_DIM

    # Batch tile: multiple of 8 sublanes.  Cap at ~ceil(B/2) so the grid has >= 2 steps
    # whenever B > 8 (keeps both v7x TensorCores busy); for tiny B use a single full tile
    # (block dim == full array dim satisfies the (8,128) rule).  The ragged last tile is
    # handled by Pallas OOB semantics — no host-side padding of x and no trailing slice.
    if B <= 8:
        tb = B
    else:
        block_b = max(8, (block_b // 8) * 8)
        tb = min(block_b, _round_up((B + 1) // 2, 8))

    grid = (pl.cdiv(B, tb),)

    def resident(shape):
        # Full-array block + constant index map -> DMA'd once, stays in VMEM across steps.
        return pl.BlockSpec(shape, lambda i: (0, 0))

    cost = pl.CostEstimate(
        flops=2 * B * (IN_DIM * H1_PAD + H1_PAD * H2_PAD + H2_PAD * OUT_DIM),
        transcendentals=0,
        bytes_accessed=B * IN_DIM * 4 + B * OUT_DIM * 4 + 43 * 1024,  # x + out + params
    )

    out = pl.pallas_call(
        mlp_kernel,
        out_shape=jax.ShapeDtypeStruct((B, OUT_DIM), jnp.float32),
        grid=grid,
        in_specs=[
            pl.BlockSpec((tb, IN_DIM), lambda i: (i, 0)),  # x: pipelined over batch tiles
            resident(w1p.shape),
            resident(b1p.shape),
            resident(w2p.shape),
            resident(b2p.shape),
            resident(w3p.shape),
            resident(b3.shape),
        ],
        # NOTE: (tb, 2) output is lane-padded to 128 in VMEM (~2*tb*128*4 B double-buffered);
        # accounted for when sizing tb, and out_dim stays 2 in HBM to keep writeback small.
        out_specs=pl.BlockSpec((tb, OUT_DIM), lambda i: (i, 0)),
        compiler_params=pltpu.CompilerParams(
            dimension_semantics=("parallel",),       # v7x: shard batch tiles over both TCs
            vmem_limit_bytes=48 * 1024 * 1024,       # headroom for tb up to ~4096
        ),
        cost_estimate=cost,
    )(x, w1p, b1p, w2p, b2p, w3p, b3)

    return out


def init_linear(key, fan_in, fan_out):
    # Matches torch.nn.Linear default init: U(-1/sqrt(fan_in), 1/sqrt(fan_in)).
    kw, kb = jax.random.split(key)
    bound = 1.0 / math.sqrt(fan_in)
    # Stored as (in, out) so the kernel computes x @ W (PyTorch stores (out, in)).
    w = jax.random.uniform(kw, (fan_in, fan_out), jnp.float32, -bound, bound)
    b = jax.random.uniform(kb, (1, fan_out), jnp.float32, -bound, bound)
    return w, b


def init_params(key):
    k1, k2, k3 = jax.random.split(key, 3)
    w1, b1 = init_linear(k1, IN_DIM, H1)
    w2, b2 = init_linear(k2, H1, H2)
    w3, b3 = init_linear(k3, H2, OUT_DIM)
    return (w1, b1, w2, b2, w3, b3)


def _reference(x, params):
    w1, b1, w2, b2, w3, b3 = params
    h = jnp.maximum(x @ w1 + b1, 0.0)
    h = jnp.maximum(h @ w2 + b2, 0.0)
    return h @ w3 + b3


if __name__ == "__main__":
    key = jax.random.PRNGKey(0)
    kp, kx, kx2 = jax.random.split(key, 3)
    params = init_params(kp)

    # Tolerances loosened vs. the f32 version because matmul operands are bf16
    # (f32 accumulation); the reference uses full f32 weights.
    ATOL = RTOL = 5e-2

    # Small-batch path: single grid step (tb == B == 8).
    B = 8
    x = jax.random.normal(kx, (B, IN_DIM), jnp.float32)
    out = jax.block_until_ready(net_forward(x, params))
    ref = _reference(x, params)
    assert out.shape == (B, OUT_DIM)
    assert jnp.allclose(out, ref, atol=ATOL, rtol=RTOL)

    # Medium batch, default block_b: tb capped at ceil(B/2)->152, grid of 2 (v7x-friendly),
    # ragged last tile handled by OOB semantics (no host padding).
    B2 = 300
    x2 = jax.random.normal(kx2, (B2, IN_DIM), jnp.float32)
    out2 = jax.block_until_ready(net_forward(x2, params))
    ref2 = _reference(x2, params)
    assert out2.shape == (B2, OUT_DIM)
    assert jnp.allclose(out2, ref2, atol=ATOL, rtol=RTOL)

    # Small tile to exercise multi-step pipelining + resident weights + ragged tail (5 steps).
    out3 = jax.block_until_ready(net_forward(x2, params, block_b=64))
    assert out3.shape == (B2, OUT_DIM)
    assert jnp.allclose(out3, ref2, atol=ATOL, rtol=RTOL)

    print("KERNEL_OK")
</pallas_src>

<mosaic_0001>
module attributes {stable_mosaic.version = 11 : i64} {
  func.func @mlp_kernel(%arg0: i32, %arg1: memref<8x30xf32, #tpu.memory_space<vmem>>, %arg2: memref<30x128xbf16, #tpu.memory_space<vmem>>, %arg3: memref<1x128xf32, #tpu.memory_space<vmem>>, %arg4: memref<128x128xbf16, #tpu.memory_space<vmem>>, %arg5: memref<1x128xf32, #tpu.memory_space<vmem>>, %arg6: memref<128x2xbf16, #tpu.memory_space<vmem>>, %arg7: memref<1x2xf32, #tpu.memory_space<vmem>>, %arg8: memref<8x2xf32, #tpu.memory_space<vmem>>) attributes {dimension_semantics = [#tpu.dimension_semantics<parallel>], iteration_bounds = array<i64: 1>, scalar_prefetch = 0 : i64, scratch_operands = 0 : i64, tpu.core_type = #tpu.core_type<tc>, window_params = [{transform_indices = @transform_0, window_bounds = array<i64: 8, 30>}, {pipeline_mode = #tpu.pipeline_mode<synchronous>, transform_indices = @transform_1, window_bounds = array<i64: 30, 128>}, {pipeline_mode = #tpu.pipeline_mode<synchronous>, transform_indices = @transform_2, window_bounds = array<i64: 1, 128>}, {pipeline_mode = #tpu.pipeline_mode<synchronous>, transform_indices = @transform_3, window_bounds = array<i64: 128, 128>}, {pipeline_mode = #tpu.pipeline_mode<synchronous>, transform_indices = @transform_4, window_bounds = array<i64: 1, 128>}, {pipeline_mode = #tpu.pipeline_mode<synchronous>, transform_indices = @transform_5, window_bounds = array<i64: 128, 2>}, {pipeline_mode = #tpu.pipeline_mode<synchronous>, transform_indices = @transform_6, window_bounds = array<i64: 1, 2>}, {transform_indices = @transform_7, window_bounds = array<i64: 8, 2>}]} {
    %c0 = arith.constant 0 : index
    %c0_0 = arith.constant 0 : index
    %0 = vector.load %arg1[%c0, %c0_0] : memref<8x30xf32, #tpu.memory_space<vmem>>, vector<8x30xf32>
    %1 = arith.truncf %0 : vector<8x30xf32> to vector<8x30xbf16>
    %c0_1 = arith.constant 0 : index
    %c0_2 = arith.constant 0 : index
    %2 = vector.load %arg2[%c0_1, %c0_2] : memref<30x128xbf16, #tpu.memory_space<vmem>>, vector<30x128xbf16>
    %cst = arith.constant dense<0.000000e+00> : vector<8x128xf32>
    %3 = tpu.matmul %1, %2, %cst {dimension_numbers = #tpu.dot_dimension_numbers<[1], [0], [0], [1], [0, 0, 1, 1], [], []>} : vector<8x30xbf16>, vector<30x128xbf16>, vector<8x128xf32> -> vector<8x128xf32>
    %c0_3 = arith.constant 0 : index
    %c0_4 = arith.constant 0 : index
    %4 = vector.load %arg3[%c0_3, %c0_4] : memref<1x128xf32, #tpu.memory_space<vmem>>, vector<1x128xf32>
    %5 = vector.broadcast %4 : vector<1x128xf32> to vector<8x128xf32>
    %6 = arith.addf %3, %5 : vector<8x128xf32>
    %cst_5 = arith.constant 0.000000e+00 : f32
    %7 = vector.broadcast %cst_5 : f32 to vector<8x128xf32>
    %8 = arith.maximumf %6, %7 : vector<8x128xf32>
    %9 = arith.truncf %8 : vector<8x128xf32> to vector<8x128xbf16>
    %c0_6 = arith.constant 0 : index
    %c0_7 = arith.constant 0 : index
    %10 = vector.load %arg4[%c0_6, %c0_7] : memref<128x128xbf16, #tpu.memory_space<vmem>>, vector<128x128xbf16>
    %cst_8 = arith.constant dense<0.000000e+00> : vector<8x128xf32>
    %11 = tpu.matmul %9, %10, %cst_8 {dimension_numbers = #tpu.dot_dimension_numbers<[1], [0], [0], [1], [0, 0, 1, 1], [], []>} : vector<8x128xbf16>, vector<128x128xbf16>, vector<8x128xf32> -> vector<8x128xf32>
    %c0_9 = arith.constant 0 : index
    %c0_10 = arith.constant 0 : index
    %12 = vector.load %arg5[%c0_9, %c0_10] : memref<1x128xf32, #tpu.memory_space<vmem>>, vector<1x128xf32>
    %13 = vector.broadcast %12 : vector<1x128xf32> to vector<8x128xf32>
    %14 = arith.addf %11, %13 : vector<8x128xf32>
    %cst_11 = arith.constant 0.000000e+00 : f32
    %15 = vector.broadcast %cst_11 : f32 to vector<8x128xf32>
    %16 = arith.maximumf %14, %15 : vector<8x128xf32>
    %17 = arith.truncf %16 : vector<8x128xf32> to vector<8x128xbf16>
    %c0_12 = arith.constant 0 : index
    %c0_13 = arith.constant 0 : index
    %18 = vector.load %arg6[%c0_12, %c0_13] : memref<128x2xbf16, #tpu.memory_space<vmem>>, vector<128x2xbf16>
    %cst_14 = arith.constant dense<0.000000e+00> : vector<8x2xf32>
    %19 = tpu.matmul %17, %18, %cst_14 {dimension_numbers = #tpu.dot_dimension_numbers<[1], [0], [0], [1], [0, 0, 1, 1], [], []>} : vector<8x128xbf16>, vector<128x2xbf16>, vector<8x2xf32> -> vector<8x2xf32>
    %c0_15 = arith.constant 0 : index
    %c0_16 = arith.constant 0 : index
    %20 = vector.load %arg7[%c0_15, %c0_16] : memref<1x2xf32, #tpu.memory_space<vmem>>, vector<1x2xf32>
    %21 = vector.broadcast %20 : vector<1x2xf32> to vector<8x2xf32>
    %22 = arith.addf %19, %21 : vector<8x2xf32>
    %c0_17 = arith.constant 0 : index
    %c0_18 = arith.constant 0 : index
    %23 = vector.load %arg8[%c0_17, %c0_18] : memref<8x2xf32, #tpu.memory_space<vmem>>, vector<8x2xf32>
    tpu.vector_store %arg8[%c0_17, %c0_18], %22 {strides = array<i32>} : memref<8x2xf32, #tpu.memory_space<vmem>>, vector<8x2xf32>,
    return
  }
  func.func @transform_0(%arg0: i32) -> (i32, i32) {
    %c0_i32 = arith.constant 0 : i32
    %c0_i32_0 = arith.constant 0 : i32
    return %arg0, %c0_i32 : i32, i32
  }
  func.func @transform_1(%arg0: i32) -> (i32, i32) {
    %c0_i32 = arith.constant 0 : i32
    %c0_i32_0 = arith.constant 0 : i32
    %c0_i32_1 = arith.constant 0 : i32
    return %c0_i32, %c0_i32_0 : i32, i32
  }
  func.func @transform_2(%arg0: i32) -> (i32, i32) {
    %c0_i32 = arith.constant 0 : i32
    %c0_i32_0 = arith.constant 0 : i32
    %c0_i32_1 = arith.constant 0 : i32
    return %c0_i32, %c0_i32_0 : i32, i32
  }
  func.func @transform_3(%arg0: i32) -> (i32, i32) {
    %c0_i32 = arith.constant 0 : i32
    %c0_i32_0 = arith.constant 0 : i32
    %c0_i32_1 = arith.constant 0 : i32
    return %c0_i32, %c0_i32_0 : i32, i32
  }
  func.func @transform_4(%arg0: i32) -> (i32, i32) {
    %c0_i32 = arith.constant 0 : i32
    %c0_i32_0 = arith.constant 0 : i32
    %c0_i32_1 = arith.constant 0 : i32
    return %c0_i32, %c0_i32_0 : i32, i32
  }
  func.func @transform_5(%arg0: i32) -> (i32, i32) {
    %c0_i32 = arith.constant 0 : i32
    %c0_i32_0 = arith.constant 0 : i32
    %c0_i32_1 = arith.constant 0 : i32
    return %c0_i32, %c0_i32_0 : i32, i32
  }
  func.func @transform_6(%arg0: i32) -> (i32, i32) {
    %c0_i32 = arith.constant 0 : i32
    %c0_i32_0 = arith.constant 0 : i32
    %c0_i32_1 = arith.constant 0 : i32
    return %c0_i32, %c0_i32_0 : i32, i32
  }
  func.func @transform_7(%arg0: i32) -> (i32, i32) {
    %c0_i32 = arith.constant 0 : i32
    %c0_i32_0 = arith.constant 0 : i32
    return %arg0, %c0_i32 : i32, i32
  }
}

</mosaic_0001>

<llo_original>
// kernel: tpu_custom_call.1
$region0: #{tpu_custom_call.1}
  #allocation0 [shape = 'u32[]', space=smem, size = 0x4, offset = 0x4, fixed_abs, tag = 'smem constant byte address 0x4 - core index']
  #allocation1 [shape = 'u32[144,128]{1,0:T(1,128)}', space=vmem, size = 0x12000, scoped, tag = 'internal scratch']
  %s0 = inlined_call_operand.vmem [shape: f32[8,30], index: 0, kind: input, shape index: {}]
  %s1 = inlined_call_operand.hbm [shape: bf16[30,128], index: 1, kind: input, shape index: {}]
  %s2 = inlined_call_operand.vmem [shape: f32[1,128], index: 2, kind: input, shape index: {}]
  %s3 = inlined_call_operand.vmem [shape: bf16[128,128], index: 3, kind: input, shape index: {}]
  %s4 = inlined_call_operand.vmem [shape: f32[1,128], index: 4, kind: input, shape index: {}]
  %s5 = inlined_call_operand.vmem [shape: bf16[128,2], index: 5, kind: input, shape index: {}]
  %s6 = inlined_call_operand.vmem [shape: f32[1,2], index: 6, kind: input, shape index: {}]
  %s7 = inlined_call_operand.vmem [shape: f32[8,2], index: 7, kind: output, shape index: {}]
  %s8 = sld [smem:[#allocation0]]
  $region42: #{tpu_custom_call.1} parent=0
    _
  %s10 = ssub.s32 1, %s8
  %s11 = scalar_select 0, %s10, %s8
  $region1: #{tpu_custom_call.1} parent=0
    #allocation2 [shape = 'u8[8192]{0}', space=vmem, size = 0x2000, scoped, tag = 'input window, operand 1, single buffered']
    #allocation3 [shape = 's32[1]{0}', space=sflag, size = 0x4, scoped, tag = 'scoped memory for tpu_custom_call.1']
    %12 = vsyncpa [#allocation3], 0
    // Predicated region
    $region2: #{tpu_custom_call.1} parent=1 // pred_check
      _
    $region3: #{tpu_custom_call.1} parent=1 // pred_check_branch
      %14 = sbr.rel (0) target = $region5
    $region4: #{tpu_custom_call.1} parent=1 // pred_region
      _
    $region5: #{tpu_custom_call.1} parent=1 // pred_fallthru
      _
    // Predicated region
    $region6: #{tpu_custom_call.1} parent=1 // pred_check
      _
    $region7: #{tpu_custom_call.1} parent=1 // pred_check_branch
      %16 = sbr.rel (0) target = $region9
    $region8: #{tpu_custom_call.1} parent=1 // pred_region
      %s18 = ssub.s32 256, 256
      %19 = vsyncadd [#allocation3], %s18
      %s20 = sshll.u32 [#allocation2], 4
      %s21 = int_to_ptr.vmem [resolvable:$true] %s20
      %26 = dma.hbm_to_vmem [thread:$0]  %s1, 256, %s21, [#allocation3], 64, 64, 4
    $region9: #{tpu_custom_call.1} parent=1 // pred_fallthru
      _
    // Predicated region
    $region10: #{tpu_custom_call.1} parent=1 // pred_check
      _
    $region11: #{tpu_custom_call.1} parent=1 // pred_check_branch
      %28 = sbr.rel (0) target = $region13
    $region12: #{tpu_custom_call.1} parent=1 // pred_region
      _
    $region13: #{tpu_custom_call.1} parent=1 // pred_fallthru
      _
    // Predicated region
    $region14: #{tpu_custom_call.1} parent=1 // pred_check
      _
    $region15: #{tpu_custom_call.1} parent=1 // pred_check_branch
      %30 = sbr.rel (0) target = $region17
    $region16: #{tpu_custom_call.1} parent=1 // pred_region
      _
    $region17: #{tpu_custom_call.1} parent=1 // pred_fallthru
      _
    // Predicated region
    $region18: #{tpu_custom_call.1} parent=1 // pred_check
      _
    $region19: #{tpu_custom_call.1} parent=1 // pred_check_branch
      %32 = sbr.rel (0) target = $region21
    $region20: #{tpu_custom_call.1} parent=1 // pred_region
      _
    $region21: #{tpu_custom_call.1} parent=1 // pred_fallthru
      _
    // Predicated region
    $region22: #{tpu_custom_call.1} parent=1 // pred_check
      _
    $region23: #{tpu_custom_call.1} parent=1 // pred_check_branch
      %34 = sbr.rel (0) target = $region25
    $region24: #{tpu_custom_call.1} parent=1 // pred_region
      _
    $region25: #{tpu_custom_call.1} parent=1 // pred_fallthru
      _
    // Predicated region
    $region26: #{tpu_custom_call.1} parent=1 // pred_check
      _
    $region27: #{tpu_custom_call.1} parent=1 // pred_check_branch
      %36 = sbr.rel (0) target = $region29
    $region28: #{tpu_custom_call.1} parent=1 // pred_region
      _
    $region29: #{tpu_custom_call.1} parent=1 // pred_fallthru
      _
    // Predicated region
    $region30: #{tpu_custom_call.1} parent=1 // pred_check
      _
    $region31: #{tpu_custom_call.1} parent=1 // pred_check_branch
      %38 = sbr.rel (0) target = $region33
    $region32: #{tpu_custom_call.1} parent=1 // pred_region
      %39 = dma.done [#allocation3], 256
    $region33: #{tpu_custom_call.1} parent=1 // pred_fallthru
      _
    %v41 = vld [vmem:[%s0] sm:$0xff]
    %v42 = vpack.c.bf16 %v41, %v41
    %v43 = vld [vmem:[#allocation2] sm:$0xf]
    %v44 = vld [vmem:[#allocation2 + $0x4] sm:$0xf]
    %v45 = vld [vmem:[#allocation2 + $0x8] sm:$0xf]
    %v46 = vld [vmem:[#allocation2 + $0xc] sm:$0x7]
    %v47 = vld [vmem:[%s2] sm:$0x1]
    %v49 = vlaneseq
    %v50 = vshrl.u32 %v49, 7
    %v51 = vsub.s32 0, %v50
    %v52 = vrot.slane %v47, %v51
    %v58 = vunpack.c.l.b16 %v43
    %v59 = vunpack.c.l.b16 %v44
    %v60 = vunpack.c.l.b16 %v45
    %v61 = vunpack.c.l.b16 %v46
    %v62 = vpack.c.b16 %v59, %v58
    %v63 = vpack.c.b16 %v61, %v60
    %vm65 = vcmask 244736
    %v67 = vsel %vm65, %v42, 0
    %vm69 = vcmask 1046528
    %v71 = vsel %vm69, %v63, 0
    %73 = vmatprep.subr.bf16.mxu0 0
    %74 = vmatpush1.bf16.msra.mxu0 %v62
    %75 = vmatprep.subr.bf16.mxu0 0
    %76 = vmatpush1.bf16.msra.mxu0 %v71
    %77 = vmatprep.subr.bf16.mxu0 0
    %78 = vmatpush1.bf16.msra.mxu0 0
    %79 = vmatprep.subr.bf16.mxu0 0
    %80 = vmatpush1.bf16.msra.mxu0 0
    %81 = vmatprep.subr.bf16.mxu0 0
    %82 = vmatpush1.bf16.msra.mxu0 0
    %83 = vmatprep.subr.bf16.mxu0 0
    %84 = vmatpush1.bf16.msra.mxu0 0
    %85 = vmatprep.subr.bf16.mxu0 0
    %86 = vmatpush1.bf16.msra.mxu0 0
    %87 = vmatprep.subr.bf16.mxu0 0
    %88 = vmatpush1.bf16.msra.mxu0 0
    %89 = vmatprep.subr.bf16.mxu0 0
    %90 = vmatpush1.bf16.msra.mxu0 0
    %91 = vmatprep.subr.bf16.mxu0 0
    %92 = vmatpush1.bf16.msra.mxu0 0
    %93 = vmatprep.subr.bf16.mxu0 0
    %94 = vmatpush1.bf16.msra.mxu0 0
    %95 = vmatprep.subr.bf16.mxu0 0
    %96 = vmatpush1.bf16.msra.mxu0 0
    %97 = vmatprep.subr.bf16.mxu0 0
    %98 = vmatpush1.bf16.msra.mxu0 0
    %99 = vmatprep.subr.bf16.mxu0 0
    %100 = vmatpush1.bf16.msra.mxu0 0
    %101 = vmatprep.subr.bf16.mxu0 0
    %102 = vmatpush1.bf16.msra.mxu0 0
    %103 = vmatprep.subr.bf16.mxu0 0
    %104 = vmatpush1.bf16.msra.mxu0 0
    %105 = vmatprep.mubr.bf16.mxu0 0
    %106 = vmatmul.mubr.bf16.gmra.mrb[0].mxu0 %v67
    %v107 = vpop.f32.mrb[0].mxu0
    %v108 = vadd.f32 %v52, %v107
    %v109 = vpop.f32.mrb[0].mxu0
    %v110 = vpop.f32.mrb[0].mxu0
    %v111 = vpop.f32.mrb[0].mxu0
    %112 = vdwg.mxu0
    %v113 = vmax.f32 %v108, 0.0
    %v114 = vpack.c.bf16 %v113, %v113
    %v115 = vld [vmem:[%s3] sm:$0xf]
    %v116 = vld [vmem:[%s3 + $0x4] sm:$0xf]
    %v117 = vld [vmem:[%s3 + $0x8] sm:$0xf]
    %v118 = vld [vmem:[%s3 + $0xc] sm:$0xf]
    %v119 = vld [vmem:[%s3 + $0x10] sm:$0xf]
    %v120 = vld [vmem:[%s3 + $0x14] sm:$0xf]
    %v121 = vld [vmem:[%s3 + $0x18] sm:$0xf]
    %v122 = vld [vmem:[%s3 + $0x1c] sm:$0xf]
    %v123 = vld [vmem:[%s3 + $0x20] sm:$0xf]
    %v124 = vld [vmem:[%s3 + $0x24] sm:$0xf]
    %v125 = vld [vmem:[%s3 + $0x28] sm:$0xf]
    %v126 = vld [vmem:[%s3 + $0x2c] sm:$0xf]
    %v127 = vld [vmem:[%s3 + $0x30] sm:$0xf]
    %v128 = vld [vmem:[%s3 + $0x34] sm:$0xf]
    %v129 = vld [vmem:[%s3 + $0x38] sm:$0xf]
    %v130 = vld [vmem:[%s3 + $0x3c] sm:$0xf]
    %v131 = vld [vmem:[%s4] sm:$0x1]
    %v133 = vlaneseq
    %v134 = vshrl.u32 %v133, 7
    %v135 = vsub.s32 0, %v134
    %v136 = vrot.slane %v131, %v135
    %v154 = vunpack.c.l.b16 %v115
    %v155 = vunpack.c.l.b16 %v116
    %v156 = vunpack.c.l.b16 %v117
    %v157 = vunpack.c.l.b16 %v118
    %v158 = vunpack.c.l.b16 %v119
    %v159 = vunpack.c.l.b16 %v120
    %v160 = vunpack.c.l.b16 %v121
    %v161 = vunpack.c.l.b16 %v122
    %v162 = vunpack.c.l.b16 %v123
    %v163 = vunpack.c.l.b16 %v124
    %v164 = vunpack.c.l.b16 %v125
    %v165 = vunpack.c.l.b16 %v126
    %v166 = vunpack.c.l.b16 %v127
    %v167 = vunpack.c.l.b16 %v128
    %v168 = vunpack.c.l.b16 %v129
    %v169 = vunpack.c.l.b16 %v130
    %v170 = vpack.c.b16 %v155, %v154
    %v171 = vpack.c.b16 %v157, %v156
    %v172 = vpack.c.b16 %v159, %v158
    %v173 = vpack.c.b16 %v161, %v160
    %v174 = vpack.c.b16 %v163, %v162
    %v175 = vpack.c.b16 %v165, %v164
    %v176 = vpack.c.b16 %v167, %v166
    %v177 = vpack.c.b16 %v169, %v168
    %186 = vmatprep.subr.bf16.mxu0 0
    %187 = vmatpush1.bf16.msra.mxu0 %v170
    %188 = vmatprep.subr.bf16.mxu0 0
    %189 = vmatpush1.bf16.msra.mxu0 %v171
    %190 = vmatprep.subr.bf16.mxu0 0
    %191 = vmatpush1.bf16.msra.mxu0 %v172
    %192 = vmatprep.subr.bf16.mxu0 0
    %193 = vmatpush1.bf16.msra.mxu0 %v173
    %194 = vmatprep.subr.bf16.mxu0 0
    %195 = vmatpush1.bf16.msra.mxu0 %v174
    %196 = vmatprep.subr.bf16.mxu0 0
    %197 = vmatpush1.bf16.msra.mxu0 %v175
    %198 = vmatprep.subr.bf16.mxu0 0
    %199 = vmatpush1.bf16.msra.mxu0 %v176
    %200 = vmatprep.subr.bf16.mxu0 0
    %201 = vmatpush1.bf16.msra.mxu0 %v177
    %202 = vmatprep.subr.bf16.mxu0 0
    %203 = vmatpush1.bf16.msra.mxu0 0
    %204 = vmatprep.subr.bf16.mxu0 0
    %205 = vmatpush1.bf16.msra.mxu0 0
    %206 = vmatprep.subr.bf16.mxu0 0
    %207 = vmatpush1.bf16.msra.mxu0 0
    %208 = vmatprep.subr.bf16.mxu0 0
    %209 = vmatpush1.bf16.msra.mxu0 0
    %210 = vmatprep.subr.bf16.mxu0 0
    %211 = vmatpush1.bf16.msra.mxu0 0
    %212 = vmatprep.subr.bf16.mxu0 0
    %213 = vmatpush1.bf16.msra.mxu0 0
    %214 = vmatprep.subr.bf16.mxu0 0
    %215 = vmatpush1.bf16.msra.mxu0 0
    %216 = vmatprep.subr.bf16.mxu0 0
    %217 = vmatpush1.bf16.msra.mxu0 0
    %218 = vmatprep.mubr.bf16.mxu0 0
    %219 = vmatmul.mubr.bf16.gmra.mrb[0].mxu0 %v114
    %v220 = vpop.f32.mrb[0].mxu0
    %v221 = vadd.f32 %v136, %v220
    %v222 = vpop.f32.mrb[0].mxu0
    %v223 = vpop.f32.mrb[0].mxu0
    %v224 = vpop.f32.mrb[0].mxu0
    %225 = vdwg.mxu0
    %v226 = vmax.f32 %v221, 0.0
    %v227 = vpack.c.bf16 %v226, %v226
    %v228 = vld [vmem:[%s5] sm:$0xf]
    %v229 = vld [vmem:[%s5 + $0x4] sm:$0xf]
    %v230 = vld [vmem:[%s5 + $0x8] sm:$0xf]
    %v231 = vld [vmem:[%s5 + $0xc] sm:$0xf]
    %v232 = vld [vmem:[%s5 + $0x10] sm:$0xf]
    %v233 = vld [vmem:[%s5 + $0x14] sm:$0xf]
    %v234 = vld [vmem:[%s5 + $0x18] sm:$0xf]
    %v235 = vld [vmem:[%s5 + $0x1c] sm:$0xf]
    %v236 = vld [vmem:[%s5 + $0x20] sm:$0xf]
    %v237 = vld [vmem:[%s5 + $0x24] sm:$0xf]
    %v238 = vld [vmem:[%s5 + $0x28] sm:$0xf]
    %v239 = vld [vmem:[%s5 + $0x2c] sm:$0xf]
    %v240 = vld [vmem:[%s5 + $0x30] sm:$0xf]
    %v241 = vld [vmem:[%s5 + $0x34] sm:$0xf]
    %v242 = vld [vmem:[%s5 + $0x38] sm:$0xf]
    %v243 = vld [vmem:[%s5 + $0x3c] sm:$0xf]
    %v244 = vld [vmem:[%s6] sm:$0x1]
    %v246 = vlaneseq
    %v247 = vshrl.u32 %v246, 7
    %v248 = vsub.s32 0, %v247
    %v249 = vrot.slane %v244, %v248
    %v267 = vunpack.c.l.b16 %v228
    %v268 = vunpack.c.l.b16 %v229
    %v269 = vunpack.c.l.b16 %v230
    %v270 = vunpack.c.l.b16 %v231
    %v271 = vunpack.c.l.b16 %v232
    %v272 = vunpack.c.l.b16 %v233
    %v273 = vunpack.c.l.b16 %v234
    %v274 = vunpack.c.l.b16 %v235
    %v275 = vunpack.c.l.b16 %v236
    %v276 = vunpack.c.l.b16 %v237
    %v277 = vunpack.c.l.b16 %v238
    %v278 = vunpack.c.l.b16 %v239
    %v279 = vunpack.c.l.b16 %v240
    %v280 = vunpack.c.l.b16 %v241
    %v281 = vunpack.c.l.b16 %v242
    %v282 = vunpack.c.l.b16 %v243
    %v283 = vpack.c.b16 %v268, %v267
    %v284 = vpack.c.b16 %v270, %v269
    %v285 = vpack.c.b16 %v272, %v271
    %v286 = vpack.c.b16 %v274, %v273
    %v287 = vpack.c.b16 %v276, %v275
    %v288 = vpack.c.b16 %v278, %v277
    %v289 = vpack.c.b16 %v280, %v279
    %v290 = vpack.c.b16 %v282, %v281
    %299 = vmatprep.subr.bf16.mxu0 0
    %300 = vmatpush1.bf16.msra.mxu0 %v283
    %301 = vmatprep.subr.bf16.mxu0 0
    %302 = vmatpush1.bf16.msra.mxu0 %v284
    %303 = vmatprep.subr.bf16.mxu0 0
    %304 = vmatpush1.bf16.msra.mxu0 %v285
    %305 = vmatprep.subr.bf16.mxu0 0
    %306 = vmatpush1.bf16.msra.mxu0 %v286
    %307 = vmatprep.subr.bf16.mxu0 0
    %308 = vmatpush1.bf16.msra.mxu0 %v287
    %309 = vmatprep.subr.bf16.mxu0 0
    %310 = vmatpush1.bf16.msra.mxu0 %v288
    %311 = vmatprep.subr.bf16.mxu0 0
    %312 = vmatpush1.bf16.msra.mxu0 %v289
    %313 = vmatprep.subr.bf16.mxu0 0
    %314 = vmatpush1.bf16.msra.mxu0 %v290
    %315 = vmatprep.subr.bf16.mxu0 0
    %316 = vmatpush1.bf16.msra.mxu0 0
    %317 = vmatprep.subr.bf16.mxu0 0
    %318 = vmatpush1.bf16.msra.mxu0 0
    %319 = vmatprep.subr.bf16.mxu0 0
    %320 = vmatpush1.bf16.msra.mxu0 0
    %321 = vmatprep.subr.bf16.mxu0 0
    %322 = vmatpush1.bf16.msra.mxu0 0
    %323 = vmatprep.subr.bf16.mxu0 0
    %324 = vmatpush1.bf16.msra.mxu0 0
    %325 = vmatprep.subr.bf16.mxu0 0
    %326 = vmatpush1.bf16.msra.mxu0 0
    %327 = vmatprep.subr.bf16.mxu0 0
    %328 = vmatpush1.bf16.msra.mxu0 0
    %329 = vmatprep.subr.bf16.mxu0 0
    %330 = vmatpush1.bf16.msra.mxu0 0
    %331 = vmatprep.mubr.bf16.mxu0 0
    %332 = vmatmul.mubr.bf16.gmra.mrb[0].mxu0 %v227
    %v333 = vpop.f32.mrb[0].mxu0
    %v334 = vadd.f32 %v249, %v333
    %v335 = vpop.f32.mrb[0].mxu0
    %v336 = vpop.f32.mrb[0].mxu0
    %v337 = vpop.f32.mrb[0].mxu0
    %338 = vdwg.mxu0
    %vm339 = vcmask 15360
    %340 = vst.msk [vmem:[%s7] sm:$0xff] %vm339, %v334
    // Predicated region
    $region34: #{tpu_custom_call.1} parent=1 // pred_check
      _
    $region35: #{tpu_custom_call.1} parent=1 // pred_check_branch
      %342 = sbr.rel (0) target = $region37
    $region36: #{tpu_custom_call.1} parent=1 // pred_region
      _
    $region37: #{tpu_custom_call.1} parent=1 // pred_fallthru
      _
    // Predicated region
    $region38: #{tpu_custom_call.1} parent=1 // pred_check
      _
    $region39: #{tpu_custom_call.1} parent=1 // pred_check_branch
      %344 = sbr.rel (0) target = $region41
    $region40: #{tpu_custom_call.1} parent=1 // pred_region
      _
    $region41: #{tpu_custom_call.1} parent=1 // pred_fallthru
      _
    %345 = vsyncpa [#allocation3], 1

</llo_original>
